<compile_context>
chip_gen: v6e
topology: v6e:2x2x1
jax: 0.10.0
libtpu: 0.0.40
codegen_flags: <defaults>
</compile_context>

<pallas_src>
import functools
import math

import jax
import jax.numpy as jnp
from jax.experimental import pallas as pl
from jax.experimental.pallas import tpu as pltpu

LANE = 128      # vreg lane width  (last dim)
SUBLANE = 8     # vreg sublane width (second-to-last dim)


def _pad_to(n, m):
    return ((n + m - 1) // m) * m


# ----------------------------- Pallas kernel ---------------------------------

def _fused_mlp_kernel(*refs, activations, mxu_dtype):
    """Fused forward of the whole Linear(+act) stack on one batch tile.

    refs = (x_ref, w0_ref, b0_ref, w1_ref, b1_ref, ..., o_ref)
      x_ref : (TB, in_f)         f32  -- true (unpadded) input feature width
      wi_ref: (k_i, n_i)         mxu_dtype -- pre-transposed nn.Linear weight.T;
                                  k_i unpadded for layer 0, else 128-lane padded;
                                  n_i 128-lane padded for hidden layers, true for last
      bi_ref: (1, n_i)           f32  -- zero-padded to n_i
      o_ref : (TB, output_size)  f32  -- true (unpadded) output width

    Intermediate activations never leave vregs/VMEM.
    """
    x_ref = refs[0]
    o_ref = refs[-1]
    wb_refs = refs[1:-1]

    h = x_ref[...]                                        # f32
    for i, act in enumerate(activations):
        w = wb_refs[2 * i][...]                           # mxu_dtype
        b = wb_refs[2 * i + 1][...]                       # f32
        # bf16 (or f32) MXU operands, f32 accumulation; bias add + activation in f32.
        h = jnp.dot(h.astype(mxu_dtype), w,
                    preferred_element_type=jnp.float32) + b
        if act == 'ReLU':
            h = jnp.maximum(h, 0.0)
        elif act == 'Sigmoid':
            # Single EUP tanh; algebraically identical to 1/(1+exp(-h)) (nn.Sigmoid)
            # and avoids the multi-instruction exact-reciprocal VPU divide.
            h = 0.5 * (jnp.tanh(0.5 * h) + 1.0)
        elif act == 'Tanh':
            h = jnp.tanh(h)
        # 'None' -> identity
    o_ref[...] = h.astype(o_ref.dtype)


# --------------------------- Model construction ------------------------------

def build_renn_params(key, input_size, hidden_layers, output_size):
    """Replicates CustomizableRENN.__init__ layer sizing with PyTorch-Linear-style
    uniform init U[-1/sqrt(fan_in), 1/sqrt(fan_in)]. Returns logical (w, b, act)
    with w in PyTorch (out_features, in_features) layout."""
    num_layers = len(hidden_layers)
    params = []
    for layer in range(num_layers):
        if layer == 0:
            in_f, out_f = input_size, hidden_layers[layer][1]
        elif layer == num_layers - 1:
            in_f, out_f = hidden_layers[layer - 1][1], output_size
        else:
            in_f, out_f = hidden_layers[layer - 1][1], hidden_layers[layer][1]
        key, kw, kb = jax.random.split(key, 3)
        bound = 1.0 / math.sqrt(in_f)
        w = jax.random.uniform(kw, (out_f, in_f), jnp.float32, -bound, bound)
        b = jax.random.uniform(kb, (out_f,), jnp.float32, -bound, bound)
        params.append((w, b, hidden_layers[layer][2]))
    return params


def pack_params_for_kernel(params, mxu_dtype=jnp.bfloat16):
    """Pre-transpose weights to (in, out), lane-pad only the *hidden* feature dims,
    and cast weights to the MXU operand dtype.

    Padding policy (exactness: padded weight rows/cols are zero, so any nonzero
    values activations place in padded lanes -- e.g. sigmoid(0)=0.5 -- never
    contaminate the next layer):
      * layer-0 K dim keeps the true input width (x is passed unpadded),
      * hidden K/N dims pad to 128 lanes (keeps intermediate vregs lane-dense),
      * last-layer N dim keeps the true output width (output written unpadded).
    TODO(synk): pad hidden dims to 256 on v6e/v7x when layer widths exceed 128 to
                match the 2x256x256 MXU; moot for the current <=128-wide layers.
    """
    num_layers = len(params)
    packed = []
    activations = []
    for i, (w, b, act) in enumerate(params):
        out_f, in_f = w.shape
        in_p = in_f if i == 0 else _pad_to(in_f, LANE)
        out_p = out_f if i == num_layers - 1 else _pad_to(out_f, LANE)
        wt = jnp.zeros((in_p, out_p), jnp.float32).at[:in_f, :out_f].set(w.T)
        bp = jnp.zeros((1, out_p), jnp.float32).at[:, :out_f].set(b)
        packed.append((wt.astype(mxu_dtype), bp))
        activations.append(act)
    return packed, tuple(activations)


# ------------------------------ Batch tiling ----------------------------------

def _choose_batch_tiling(batch, cap=1024):
    """Pick (padded_batch, batch_tile).

      * batch_tile is a multiple of 8 (sublane), or the whole (already tiny) batch.
      * Prefer an exact divisor of the 8-padded batch -> no dead rows and no x copy
        for already-aligned batches.
      * Produce >= 2 grid steps whenever batch >= 16 so the "parallel" batch axis
        shards across v7x's two TensorCores (no effect on v5e/v6e).
      * Cap tiles at `cap` rows (>=512-row tiles already sit at ~85% of the HBM
        roofline; working set stays far under scoped VMEM).
      * If the only divisors are tiny (e.g. 8 * prime), accept a ragged final tile
        (bounded dead work) rather than hundreds of 8-row grid steps.
    """
    b8 = _pad_to(max(batch, 1), SUBLANE)
    if b8 <= SUBLANE:
        return b8, b8
    target = min(cap, _pad_to((b8 + 1) // 2, SUBLANE))
    best_div = SUBLANE
    t = SUBLANE
    while t <= target:
        if b8 % t == 0:
            best_div = t
        t += SUBLANE
    if best_div >= min(target, 256) or best_div * 64 >= b8:
        return b8, best_div
    return _pad_to(b8, target), target


# ------------------------------ Forward pass ----------------------------------

def renn_forward(x, packed, activations, output_size, *, batch_cap=1024):
    """CustomizableRENN.forward as a single fused Pallas kernel call."""
    batch, in_f = x.shape
    assert packed[0][0].shape[0] == in_f, "x feature dim must match layer-0 weight"
    out_n = packed[-1][0].shape[1]
    assert out_n == output_size

    b_pad, batch_tile = _choose_batch_tiling(batch, cap=batch_cap)
    # Only copy/pad rows when the batch is not already tile-aligned.
    x_in = x if b_pad == batch else jnp.zeros((b_pad, in_f), x.dtype).at[:batch].set(x)

    kernel = functools.partial(_fused_mlp_kernel, activations=activations,
                               mxu_dtype=packed[0][0].dtype)

    in_specs = [pl.BlockSpec((batch_tile, in_f), lambda i: (i, 0))]
    flat_args = [x_in]
    for wt, bp in packed:
        # Constant index_map -> weights/biases DMA'd once and stay VMEM-resident.
        in_specs.append(pl.BlockSpec(wt.shape, lambda i: (0, 0)))
        in_specs.append(pl.BlockSpec(bp.shape, lambda i: (0, 0)))
        flat_args.append(wt)
        flat_args.append(bp)

    # VMEM guard: x/out tiles are double-buffered by the pipeline and the whole
    # (double-buffered) weight stack stays resident.
    # TODO(synk): when wider hidden layers push this estimate toward v7x's 64 MiB
    #             physical VMEM, mark weight specs pipeline_mode=pl.Buffered(1)
    #             and/or add a K-reduction grid axis ("arbitrary") with an f32 VMEM
    #             accumulator instead of keeping every layer resident.
    weight_bytes = sum(int(w.size) * w.dtype.itemsize + int(b.size) * b.dtype.itemsize
                       for w, b in packed)
    max_width = max([in_f] + [w.shape[1] for w, _ in packed])
    io_bytes = batch_tile * (in_f + out_n) * 4
    act_bytes = 3 * batch_tile * max_width * 4          # headroom for live activations
    est_vmem = 2 * (weight_bytes + io_bytes) + act_bytes
    vmem_limit = int(min(64 << 20, max(32 << 20, 2 * est_vmem)))

    out = pl.pallas_call(
        kernel,
        out_shape=jax.ShapeDtypeStruct((b_pad, out_n), jnp.float32),
        grid=(b_pad // batch_tile,),
        in_specs=in_specs,
        out_specs=pl.BlockSpec((batch_tile, out_n), lambda i: (i, 0)),
        compiler_params=pltpu.CompilerParams(
            dimension_semantics=("parallel",),
            vmem_limit_bytes=vmem_limit),
    )(*flat_args)

    return out if b_pad == batch else out[:batch]


def renn_forward_ref(x, params, mxu_dtype=jnp.float32):
    """Pure-JAX reference matching nn.Linear / nn.ReLU / nn.Sigmoid / nn.Tanh.
    mxu_dtype=bf16 mirrors the kernel's bf16-operand / f32-accumulate matmuls."""
    h = x
    for w, b, act in params:
        h = jax.lax.dot_general(h.astype(mxu_dtype), w.T.astype(mxu_dtype),
                                (((1,), (0,)), ((), ())),
                                preferred_element_type=jnp.float32) + b
        if act == 'ReLU':
            h = jnp.maximum(h, 0.0)
        elif act == 'Sigmoid':
            h = jax.nn.sigmoid(h)
        elif act == 'Tanh':
            h = jnp.tanh(h)
    return h


# ---------------------------------- main --------------------------------------

if __name__ == "__main__":
    # hidden_layers entries: (layer_type, width, activation). Last entry's width is
    # ignored in favor of output_size, mirroring the original sizing logic.
    hidden_layers = [
        ('Linear', 64, 'ReLU'),
        ('Linear', 48, 'Sigmoid'),
        ('Linear', 40, 'None'),
        ('Linear', 32, 'Tanh'),
    ]
    input_size = 32
    output_size = 16
    batch = 8

    key = jax.random.PRNGKey(0)
    key, kx = jax.random.split(key)
    x = jax.random.normal(kx, (batch, input_size), jnp.float32)

    params = build_renn_params(key, input_size, hidden_layers, output_size)

    # Exact-f32 (nn.Linear-faithful) reference.
    ref = renn_forward_ref(x, params, mxu_dtype=jnp.float32)

    # --- strict f32 path: faithful to the PyTorch module's numerics ---
    packed_f32, activations = pack_params_for_kernel(params, mxu_dtype=jnp.float32)
    out_f32 = jax.block_until_ready(
        renn_forward(x, packed_f32, activations, output_size))
    assert out_f32.shape == (batch, output_size), out_f32.shape
    assert jnp.allclose(out_f32, ref, atol=1e-5, rtol=1e-5), \
        "f32 kernel mismatch vs reference"

    # --- default fast path: bf16 MXU operands, f32 accumulation ---
    packed_bf16, _ = pack_params_for_kernel(params, mxu_dtype=jnp.bfloat16)
    out_bf16 = jax.block_until_ready(
        renn_forward(x, packed_bf16, activations, output_size))
    assert out_bf16.shape == (batch, output_size), out_bf16.shape
    assert jnp.allclose(out_bf16, ref, atol=5e-2, rtol=5e-2), \
        "bf16 kernel outside bf16 MXU tolerance vs reference"

    print("KERNEL_OK")
</pallas_src>

<mosaic_0001>
module attributes {stable_mosaic.version = 11 : i64} {
  func.func @_fused_mlp_kernel(%arg0: i32, %arg1: memref<8x32xf32, #tpu.memory_space<vmem>>, %arg2: memref<32x128xf32, #tpu.memory_space<vmem>>, %arg3: memref<1x128xf32, #tpu.memory_space<vmem>>, %arg4: memref<128x128xf32, #tpu.memory_space<vmem>>, %arg5: memref<1x128xf32, #tpu.memory_space<vmem>>, %arg6: memref<128x128xf32, #tpu.memory_space<vmem>>, %arg7: memref<1x128xf32, #tpu.memory_space<vmem>>, %arg8: memref<128x16xf32, #tpu.memory_space<vmem>>, %arg9: memref<1x16xf32, #tpu.memory_space<vmem>>, %arg10: memref<8x16xf32, #tpu.memory_space<vmem>>) attributes {dimension_semantics = [#tpu.dimension_semantics<parallel>], iteration_bounds = array<i64: 1>, scalar_prefetch = 0 : i64, scratch_operands = 0 : i64, tpu.core_type = #tpu.core_type<tc>, window_params = [{transform_indices = @transform_0, window_bounds = array<i64: 8, 32>}, {pipeline_mode = #tpu.pipeline_mode<synchronous>, transform_indices = @transform_1, window_bounds = array<i64: 32, 128>}, {pipeline_mode = #tpu.pipeline_mode<synchronous>, transform_indices = @transform_2, window_bounds = array<i64: 1, 128>}, {pipeline_mode = #tpu.pipeline_mode<synchronous>, transform_indices = @transform_3, window_bounds = array<i64: 128, 128>}, {pipeline_mode = #tpu.pipeline_mode<synchronous>, transform_indices = @transform_4, window_bounds = array<i64: 1, 128>}, {pipeline_mode = #tpu.pipeline_mode<synchronous>, transform_indices = @transform_5, window_bounds = array<i64: 128, 128>}, {pipeline_mode = #tpu.pipeline_mode<synchronous>, transform_indices = @transform_6, window_bounds = array<i64: 1, 128>}, {pipeline_mode = #tpu.pipeline_mode<synchronous>, transform_indices = @transform_7, window_bounds = array<i64: 128, 16>}, {pipeline_mode = #tpu.pipeline_mode<synchronous>, transform_indices = @transform_8, window_bounds = array<i64: 1, 16>}, {transform_indices = @transform_9, window_bounds = array<i64: 8, 16>}]} {
    %c0 = arith.constant 0 : index
    %c0_0 = arith.constant 0 : index
    %0 = vector.load %arg1[%c0, %c0_0] : memref<8x32xf32, #tpu.memory_space<vmem>>, vector<8x32xf32>
    %c0_1 = arith.constant 0 : index
    %c0_2 = arith.constant 0 : index
    %1 = vector.load %arg2[%c0_1, %c0_2] : memref<32x128xf32, #tpu.memory_space<vmem>>, vector<32x128xf32>
    %c0_3 = arith.constant 0 : index
    %c0_4 = arith.constant 0 : index
    %2 = vector.load %arg3[%c0_3, %c0_4] : memref<1x128xf32, #tpu.memory_space<vmem>>, vector<1x128xf32>
    %cst = arith.constant dense<0.000000e+00> : vector<8x128xf32>
    %3 = tpu.matmul %0, %1, %cst {dimension_numbers = #tpu.dot_dimension_numbers<[1], [0], [0], [1], [0, 0, 1, 1], [], []>} : vector<8x32xf32>, vector<32x128xf32>, vector<8x128xf32> -> vector<8x128xf32>
    %4 = vector.broadcast %2 : vector<1x128xf32> to vector<8x128xf32>
    %5 = arith.addf %3, %4 : vector<8x128xf32>
    %cst_5 = arith.constant 0.000000e+00 : f32
    %6 = vector.broadcast %cst_5 : f32 to vector<8x128xf32>
    %7 = arith.maximumf %5, %6 : vector<8x128xf32>
    %c0_6 = arith.constant 0 : index
    %c0_7 = arith.constant 0 : index
    %8 = vector.load %arg4[%c0_6, %c0_7] : memref<128x128xf32, #tpu.memory_space<vmem>>, vector<128x128xf32>
    %c0_8 = arith.constant 0 : index
    %c0_9 = arith.constant 0 : index
    %9 = vector.load %arg5[%c0_8, %c0_9] : memref<1x128xf32, #tpu.memory_space<vmem>>, vector<1x128xf32>
    %cst_10 = arith.constant dense<0.000000e+00> : vector<8x128xf32>
    %10 = tpu.matmul %7, %8, %cst_10 {dimension_numbers = #tpu.dot_dimension_numbers<[1], [0], [0], [1], [0, 0, 1, 1], [], []>} : vector<8x128xf32>, vector<128x128xf32>, vector<8x128xf32> -> vector<8x128xf32>
    %11 = vector.broadcast %9 : vector<1x128xf32> to vector<8x128xf32>
    %12 = arith.addf %10, %11 : vector<8x128xf32>
    %cst_11 = arith.constant 5.000000e-01 : f32
    %13 = vector.broadcast %cst_11 : f32 to vector<8x128xf32>
    %14 = arith.mulf %13, %12 : vector<8x128xf32>
    %15 = math.tanh %14 : vector<8x128xf32>
    %cst_12 = arith.constant 1.000000e+00 : f32
    %16 = vector.broadcast %cst_12 : f32 to vector<8x128xf32>
    %17 = arith.addf %15, %16 : vector<8x128xf32>
    %cst_13 = arith.constant 5.000000e-01 : f32
    %18 = vector.broadcast %cst_13 : f32 to vector<8x128xf32>
    %19 = arith.mulf %18, %17 : vector<8x128xf32>
    %c0_14 = arith.constant 0 : index
    %c0_15 = arith.constant 0 : index
    %20 = vector.load %arg6[%c0_14, %c0_15] : memref<128x128xf32, #tpu.memory_space<vmem>>, vector<128x128xf32>
    %c0_16 = arith.constant 0 : index
    %c0_17 = arith.constant 0 : index
    %21 = vector.load %arg7[%c0_16, %c0_17] : memref<1x128xf32, #tpu.memory_space<vmem>>, vector<1x128xf32>
    %cst_18 = arith.constant dense<0.000000e+00> : vector<8x128xf32>
    %22 = tpu.matmul %19, %20, %cst_18 {dimension_numbers = #tpu.dot_dimension_numbers<[1], [0], [0], [1], [0, 0, 1, 1], [], []>} : vector<8x128xf32>, vector<128x128xf32>, vector<8x128xf32> -> vector<8x128xf32>
    %23 = vector.broadcast %21 : vector<1x128xf32> to vector<8x128xf32>
    %24 = arith.addf %22, %23 : vector<8x128xf32>
    %c0_19 = arith.constant 0 : index
    %c0_20 = arith.constant 0 : index
    %25 = vector.load %arg8[%c0_19, %c0_20] : memref<128x16xf32, #tpu.memory_space<vmem>>, vector<128x16xf32>
    %c0_21 = arith.constant 0 : index
    %c0_22 = arith.constant 0 : index
    %26 = vector.load %arg9[%c0_21, %c0_22] : memref<1x16xf32, #tpu.memory_space<vmem>>, vector<1x16xf32>
    %cst_23 = arith.constant dense<0.000000e+00> : vector<8x16xf32>
    %27 = tpu.matmul %24, %25, %cst_23 {dimension_numbers = #tpu.dot_dimension_numbers<[1], [0], [0], [1], [0, 0, 1, 1], [], []>} : vector<8x128xf32>, vector<128x16xf32>, vector<8x16xf32> -> vector<8x16xf32>
    %28 = vector.broadcast %26 : vector<1x16xf32> to vector<8x16xf32>
    %29 = arith.addf %27, %28 : vector<8x16xf32>
    %30 = math.tanh %29 : vector<8x16xf32>
    %c0_24 = arith.constant 0 : index
    %c0_25 = arith.constant 0 : index
    %31 = vector.load %arg10[%c0_24, %c0_25] : memref<8x16xf32, #tpu.memory_space<vmem>>, vector<8x16xf32>
    tpu.vector_store %arg10[%c0_24, %c0_25], %30 {strides = array<i32>} : memref<8x16xf32, #tpu.memory_space<vmem>>, vector<8x16xf32>,
    return
  }
  func.func @transform_0(%arg0: i32) -> (i32, i32) {
    %c0_i32 = arith.constant 0 : i32
    %c0_i32_0 = arith.constant 0 : i32
    return %arg0, %c0_i32 : i32, i32
  }
  func.func @transform_1(%arg0: i32) -> (i32, i32) {
    %c0_i32 = arith.constant 0 : i32
    %c0_i32_0 = arith.constant 0 : i32
    %c0_i32_1 = arith.constant 0 : i32
    return %c0_i32, %c0_i32_0 : i32, i32
  }
  func.func @transform_2(%arg0: i32) -> (i32, i32) {
    %c0_i32 = arith.constant 0 : i32
    %c0_i32_0 = arith.constant 0 : i32
    %c0_i32_1 = arith.constant 0 : i32
    return %c0_i32, %c0_i32_0 : i32, i32
  }
  func.func @transform_3(%arg0: i32) -> (i32, i32) {
    %c0_i32 = arith.constant 0 : i32
    %c0_i32_0 = arith.constant 0 : i32
    %c0_i32_1 = arith.constant 0 : i32
    return %c0_i32, %c0_i32_0 : i32, i32
  }
  func.func @transform_4(%arg0: i32) -> (i32, i32) {
    %c0_i32 = arith.constant 0 : i32
    %c0_i32_0 = arith.constant 0 : i32
    %c0_i32_1 = arith.constant 0 : i32
    return %c0_i32, %c0_i32_0 : i32, i32
  }
  func.func @transform_5(%arg0: i32) -> (i32, i32) {
    %c0_i32 = arith.constant 0 : i32
    %c0_i32_0 = arith.constant 0 : i32
    %c0_i32_1 = arith.constant 0 : i32
    return %c0_i32, %c0_i32_0 : i32, i32
  }
  func.func @transform_6(%arg0: i32) -> (i32, i32) {
    %c0_i32 = arith.constant 0 : i32
    %c0_i32_0 = arith.constant 0 : i32
    %c0_i32_1 = arith.constant 0 : i32
    return %c0_i32, %c0_i32_0 : i32, i32
  }
  func.func @transform_7(%arg0: i32) -> (i32, i32) {
    %c0_i32 = arith.constant 0 : i32
    %c0_i32_0 = arith.constant 0 : i32
    %c0_i32_1 = arith.constant 0 : i32
    return %c0_i32, %c0_i32_0 : i32, i32
  }
  func.func @transform_8(%arg0: i32) -> (i32, i32) {
    %c0_i32 = arith.constant 0 : i32
    %c0_i32_0 = arith.constant 0 : i32
    %c0_i32_1 = arith.constant 0 : i32
    return %c0_i32, %c0_i32_0 : i32, i32
  }
  func.func @transform_9(%arg0: i32) -> (i32, i32) {
    %c0_i32 = arith.constant 0 : i32
    %c0_i32_0 = arith.constant 0 : i32
    return %arg0, %c0_i32 : i32, i32
  }
}

</mosaic_0001>

<llo_original>
// kernel: tpu_custom_call.1
$region0: #{tpu_custom_call.1}
  #allocation0 [shape = 'u32[]', space=smem, size = 0x4, offset = 0x4, fixed_abs, tag = 'smem constant byte address 0x4 - core index']
  #allocation1 [shape = 'u32[144,128]{1,0:T(1,128)}', space=vmem, size = 0x12000, scoped, tag = 'internal scratch']
  %s0 = inlined_call_operand.vmem [shape: f32[8,32], index: 0, kind: input, shape index: {}]
  %s1 = inlined_call_operand.hbm [shape: f32[32,128], index: 1, kind: input, shape index: {}]
  %s2 = inlined_call_operand.vmem [shape: f32[1,128], index: 2, kind: input, shape index: {}]
  %s3 = inlined_call_operand.vmem [shape: f32[128,128], index: 3, kind: input, shape index: {}]
  %s4 = inlined_call_operand.vmem [shape: f32[1,128], index: 4, kind: input, shape index: {}]
  %s5 = inlined_call_operand.hbm [shape: f32[128,128], index: 5, kind: input, shape index: {}]
  %s6 = inlined_call_operand.vmem [shape: f32[1,128], index: 6, kind: input, shape index: {}]
  %s7 = inlined_call_operand.vmem [shape: f32[128,16], index: 7, kind: input, shape index: {}]
  %s8 = inlined_call_operand.vmem [shape: f32[1,16], index: 8, kind: input, shape index: {}]
  %s9 = inlined_call_operand.hbm [shape: f32[8,16], index: 9, kind: output, shape index: {}]
  %s10 = sld [smem:[#allocation0]]
  $region54: #{tpu_custom_call.1} parent=0
    _
  %s12 = ssub.s32 1, %s10
  %s13 = scalar_select 0, %s12, %s10
  $region1: #{tpu_custom_call.1} parent=0
    #allocation2 [shape = 'u8[16384]{0}', space=vmem, size = 0x4000, scoped, tag = 'input window, operand 1, single buffered']
    #allocation3 [shape = 's32[1]{0}', space=sflag, size = 0x4, scoped, tag = 'scoped memory for tpu_custom_call.1']
    #allocation4 [shape = 's32[1]{0}', space=sflag, size = 0x4, scoped, tag = 'scoped memory for tpu_custom_call.1']
    #allocation5 [shape = 'u8[65536]{0}', space=vmem, size = 0x10000, scoped, tag = 'input window, operand 5, single buffered']
    #allocation6 [shape = 's32[1]{0}', space=sflag, size = 0x4, scoped, tag = 'scoped memory for tpu_custom_call.1']
    #allocation7 [shape = 'u8[4096]{0}', space=vmem, size = 0x1000, scoped, tag = 'output window, operand 0, single buffered']
    %14 = vsyncpa [#allocation3], 0
    %15 = vsyncpa [#allocation6], 0
    %16 = vsyncpa [#allocation4], 0
    // Predicated region
    $region2: #{tpu_custom_call.1} parent=1 // pred_check
      _
    $region3: #{tpu_custom_call.1} parent=1 // pred_check_branch
      %18 = sbr.rel (0) target = $region5
    $region4: #{tpu_custom_call.1} parent=1 // pred_region
      _
    $region5: #{tpu_custom_call.1} parent=1 // pred_fallthru
      _
    // Predicated region
    $region6: #{tpu_custom_call.1} parent=1 // pred_check
      _
    $region7: #{tpu_custom_call.1} parent=1 // pred_check_branch
      %20 = sbr.rel (0) target = $region9
    $region8: #{tpu_custom_call.1} parent=1 // pred_region
      %s22 = ssub.s32 512, 512
      %23 = vsyncadd [#allocation3], %s22
      %s24 = sshll.u32 [#allocation2], 4
      %s25 = int_to_ptr.vmem [resolvable:$true] %s24
      %30 = dma.hbm_to_vmem [thread:$0]  %s1, 512, %s25, [#allocation3], 128, 128, 8
    $region9: #{tpu_custom_call.1} parent=1 // pred_fallthru
      _
    // Predicated region
    $region10: #{tpu_custom_call.1} parent=1 // pred_check
      _
    $region11: #{tpu_custom_call.1} parent=1 // pred_check_branch
      %32 = sbr.rel (0) target = $region13
    $region12: #{tpu_custom_call.1} parent=1 // pred_region
      _
    $region13: #{tpu_custom_call.1} parent=1 // pred_fallthru
      _
    // Predicated region
    $region14: #{tpu_custom_call.1} parent=1 // pred_check
      _
    $region15: #{tpu_custom_call.1} parent=1 // pred_check_branch
      %34 = sbr.rel (0) target = $region17
    $region16: #{tpu_custom_call.1} parent=1 // pred_region
      _
    $region17: #{tpu_custom_call.1} parent=1 // pred_fallthru
      _
    // Predicated region
    $region18: #{tpu_custom_call.1} parent=1 // pred_check
      _
    $region19: #{tpu_custom_call.1} parent=1 // pred_check_branch
      %36 = sbr.rel (0) target = $region21
    $region20: #{tpu_custom_call.1} parent=1 // pred_region
      _
    $region21: #{tpu_custom_call.1} parent=1 // pred_fallthru
      _
    // Predicated region
    $region22: #{tpu_custom_call.1} parent=1 // pred_check
      _
    $region23: #{tpu_custom_call.1} parent=1 // pred_check_branch
      %38 = sbr.rel (0) target = $region25
    $region24: #{tpu_custom_call.1} parent=1 // pred_region
      %s40 = ssub.s32 2048, 2048
      %41 = vsyncadd [#allocation6], %s40
      %s42 = sshll.u32 [#allocation5], 4
      %s43 = int_to_ptr.vmem [resolvable:$true] %s42
      %48 = dma.hbm_to_vmem [thread:$0]  %s5, 2048, %s43, [#allocation6], 128, 128, 8
    $region25: #{tpu_custom_call.1} parent=1 // pred_fallthru
      _
    // Predicated region
    $region26: #{tpu_custom_call.1} parent=1 // pred_check
      _
    $region27: #{tpu_custom_call.1} parent=1 // pred_check_branch
      %50 = sbr.rel (0) target = $region29
    $region28: #{tpu_custom_call.1} parent=1 // pred_region
      _
    $region29: #{tpu_custom_call.1} parent=1 // pred_fallthru
      _
    // Predicated region
    $region30: #{tpu_custom_call.1} parent=1 // pred_check
      _
    $region31: #{tpu_custom_call.1} parent=1 // pred_check_branch
      %52 = sbr.rel (0) target = $region33
    $region32: #{tpu_custom_call.1} parent=1 // pred_region
      _
    $region33: #{tpu_custom_call.1} parent=1 // pred_fallthru
      _
    // Predicated region
    $region34: #{tpu_custom_call.1} parent=1 // pred_check
      _
    $region35: #{tpu_custom_call.1} parent=1 // pred_check_branch
      %54 = sbr.rel (0) target = $region37
    $region36: #{tpu_custom_call.1} parent=1 // pred_region
      _
    $region37: #{tpu_custom_call.1} parent=1 // pred_fallthru
      _
    // Predicated region
    $region38: #{tpu_custom_call.1} parent=1 // pred_check
      _
    $region39: #{tpu_custom_call.1} parent=1 // pred_check_branch
      %56 = sbr.rel (0) target = $region41
    $region40: #{tpu_custom_call.1} parent=1 // pred_region
      %57 = dma.done [#allocation3], 512
    $region41: #{tpu_custom_call.1} parent=1 // pred_fallthru
      _
    // Predicated region
    $region42: #{tpu_custom_call.1} parent=1 // pred_check
      _
    $region43: #{tpu_custom_call.1} parent=1 // pred_check_branch
      %59 = sbr.rel (0) target = $region45
    $region44: #{tpu_custom_call.1} parent=1 // pred_region
      %60 = dma.done [#allocation6], 2048
    $region45: #{tpu_custom_call.1} parent=1 // pred_fallthru
      _
    %v61 = vld [vmem:[%s0] sm:$0xff]
    %v62 = vld [vmem:[#allocation2] sm:$0xff]
    %v63 = vld [vmem:[#allocation2 + $0x8] sm:$0xff]
    %v64 = vld [vmem:[#allocation2 + $0x10] sm:$0xff]
    %v65 = vld [vmem:[#allocation2 + $0x18] sm:$0xff]
    %v66 = vld [vmem:[%s2] sm:$0x1]
    %v68 = vlaneseq
    %v69 = vshrl.u32 %v68, 7
    %v70 = vsub.s32 0, %v69
    %v71 = vrot.slane %v66, %v70
    %vm73 = vcmask 261120
    %v75 = vsel %vm73, %v61, 0
    %77 = vmatprep.subr.mxu0 0.0
    %78 = vmatpush1.msra.mxu0 0.0
    %79 = vmatprep.subr.mxu0 0.0
    %80 = vmatpush1.msra.mxu0 0.0
    %81 = vmatprep.subr.mxu0 0.0
    %82 = vmatpush1.msra.mxu0 0.0
    %83 = vmatprep.subr.mxu0 0.0
    %84 = vmatpush1.msra.mxu0 0.0
    %85 = vmatprep.subr.mxu0 0.0
    %86 = vmatpush1.msra.mxu0 0.0
    %87 = vmatprep.subr.mxu0 0.0
    %88 = vmatpush1.msra.mxu0 0.0
    %89 = vmatprep.subr.mxu0 0.0
    %90 = vmatpush1.msra.mxu0 0.0
    %91 = vmatprep.subr.mxu0 0.0
    %92 = vmatpush1.msra.mxu0 0.0
    %93 = vmatprep.subr.mxu0 0.0
    %94 = vmatpush1.msra.mxu0 0.0
    %95 = vmatprep.subr.mxu0 0.0
    %96 = vmatpush1.msra.mxu0 0.0
    %97 = vmatprep.subr.mxu0 0.0
    %98 = vmatpush1.msra.mxu0 0.0
    %99 = vmatprep.subr.mxu0 0.0
    %100 = vmatpush1.msra.mxu0 0.0
    %101 = vmatprep.subr.mxu0 0.0
    %102 = vmatpush1.msra.mxu0 %v65
    %103 = vmatprep.subr.mxu0 0.0
    %104 = vmatpush1.msra.mxu0 %v64
    %105 = vmatprep.subr.mxu0 0.0
    %106 = vmatpush1.msra.mxu0 %v63
    %107 = vmatprep.subr.mxu0 0.0
    %108 = vmatpush1.msra.mxu0 %v62
    %109 = vmatprep.subr.mxu0 0.0
    %110 = vmatpush2.msra.mxu0 0.0
    %111 = vmatprep.subr.mxu0 0.0
    %112 = vmatpush2.msra.mxu0 0.0
    %113 = vmatprep.subr.mxu0 0.0
    %114 = vmatpush2.msra.mxu0 0.0
    %115 = vmatprep.subr.mxu0 0.0
    %116 = vmatpush2.msra.mxu0 0.0
    %117 = vmatprep.subr.mxu0 0.0
    %118 = vmatpush2.msra.mxu0 0.0
    %119 = vmatprep.subr.mxu0 0.0
    %120 = vmatpush2.msra.mxu0 0.0
    %121 = vmatprep.subr.mxu0 0.0
    %122 = vmatpush2.msra.mxu0 0.0
    %123 = vmatprep.subr.mxu0 0.0
    %124 = vmatpush2.msra.mxu0 0.0
    %125 = vmatprep.subr.mxu0 0.0
    %126 = vmatpush2.msra.mxu0 0.0
    %127 = vmatprep.subr.mxu0 0.0
    %128 = vmatpush2.msra.mxu0 0.0
    %129 = vmatprep.subr.mxu0 0.0
    %130 = vmatpush2.msra.mxu0 0.0
    %131 = vmatprep.subr.mxu0 0.0
    %132 = vmatpush2.msra.mxu0 0.0
    %133 = vmatprep.subr.mxu0 0.0
    %134 = vmatpush2.msra.mxu0 0.0
    %135 = vmatprep.subr.mxu0 0.0
    %136 = vmatpush2.msra.mxu0 0.0
    %137 = vmatprep.subr.mxu0 0.0
    %138 = vmatpush2.msra.mxu0 0.0
    %139 = vmatprep.subr.mxu0 0.0
    %140 = vmatpush2.msra.mxu0 0.0
    %141 = vmatprep.mubr.f32.mxu0 0.0
    %142 = vmatmul.mubr.f32.gmra.mxu0 %v75
    %v143 = vpop.f32.mrf.mxu0
    %v144 = vadd.f32 %v71, %v143
    %v145 = vpop.f32.mrf.mxu0
    %146 = vdwg.mxu0
    %v147 = vmax.f32 %v144, 0.0
    %v148 = vld [vmem:[%s3] sm:$0xff]
    %v149 = vld [vmem:[%s3 + $0x8] sm:$0xff]
    %v150 = vld [vmem:[%s3 + $0x10] sm:$0xff]
    %v151 = vld [vmem:[%s3 + $0x18] sm:$0xff]
    %v152 = vld [vmem:[%s3 + $0x20] sm:$0xff]
    %v153 = vld [vmem:[%s3 + $0x28] sm:$0xff]
    %v154 = vld [vmem:[%s3 + $0x30] sm:$0xff]
    %v155 = vld [vmem:[%s3 + $0x38] sm:$0xff]
    %v156 = vld [vmem:[%s3 + $0x40] sm:$0xff]
    %v157 = vld [vmem:[%s3 + $0x48] sm:$0xff]
    %v158 = vld [vmem:[%s3 + $0x50] sm:$0xff]
    %v159 = vld [vmem:[%s3 + $0x58] sm:$0xff]
    %v160 = vld [vmem:[%s3 + $0x60] sm:$0xff]
    %v161 = vld [vmem:[%s3 + $0x68] sm:$0xff]
    %v162 = vld [vmem:[%s3 + $0x70] sm:$0xff]
    %v163 = vld [vmem:[%s3 + $0x78] sm:$0xff]
    %v164 = vld [vmem:[%s4] sm:$0x1]
    %v166 = vlaneseq
    %v167 = vshrl.u32 %v166, 7
    %v168 = vsub.s32 0, %v167
    %v169 = vrot.slane %v164, %v168
    %171 = vmatprep.subr.mxu0 0.0
    %172 = vmatpush1.msra.mxu0 %v163
    %173 = vmatprep.subr.mxu0 0.0
    %174 = vmatpush1.msra.mxu0 %v162
    %175 = vmatprep.subr.mxu0 0.0
    %176 = vmatpush1.msra.mxu0 %v161
    %177 = vmatprep.subr.mxu0 0.0
    %178 = vmatpush1.msra.mxu0 %v160
    %179 = vmatprep.subr.mxu0 0.0
    %180 = vmatpush1.msra.mxu0 %v159
    %181 = vmatprep.subr.mxu0 0.0
    %182 = vmatpush1.msra.mxu0 %v158
    %183 = vmatprep.subr.mxu0 0.0
    %184 = vmatpush1.msra.mxu0 %v157
    %185 = vmatprep.subr.mxu0 0.0
    %186 = vmatpush1.msra.mxu0 %v156
    %187 = vmatprep.subr.mxu0 0.0
    %188 = vmatpush1.msra.mxu0 %v155
    %189 = vmatprep.subr.mxu0 0.0
    %190 = vmatpush1.msra.mxu0 %v154
    %191 = vmatprep.subr.mxu0 0.0
    %192 = vmatpush1.msra.mxu0 %v153
    %193 = vmatprep.subr.mxu0 0.0
    %194 = vmatpush1.msra.mxu0 %v152
    %195 = vmatprep.subr.mxu0 0.0
    %196 = vmatpush1.msra.mxu0 %v151
    %197 = vmatprep.subr.mxu0 0.0
    %198 = vmatpush1.msra.mxu0 %v150
    %199 = vmatprep.subr.mxu0 0.0
    %200 = vmatpush1.msra.mxu0 %v149
    %201 = vmatprep.subr.mxu0 0.0
    %202 = vmatpush1.msra.mxu0 %v148
    %203 = vmatprep.subr.mxu0 0.0
    %204 = vmatpush2.msra.mxu0 0.0
    %205 = vmatprep.subr.mxu0 0.0
    %206 = vmatpush2.msra.mxu0 0.0
    %207 = vmatprep.subr.mxu0 0.0
    %208 = vmatpush2.msra.mxu0 0.0
    %209 = vmatprep.subr.mxu0 0.0
    %210 = vmatpush2.msra.mxu0 0.0
    %211 = vmatprep.subr.mxu0 0.0
    %212 = vmatpush2.msra.mxu0 0.0
    %213 = vmatprep.subr.mxu0 0.0
    %214 = vmatpush2.msra.mxu0 0.0
    %215 = vmatprep.subr.mxu0 0.0
    %216 = vmatpush2.msra.mxu0 0.0
    %217 = vmatprep.subr.mxu0 0.0
    %218 = vmatpush2.msra.mxu0 0.0
    %219 = vmatprep.subr.mxu0 0.0
    %220 = vmatpush2.msra.mxu0 0.0
    %221 = vmatprep.subr.mxu0 0.0
    %222 = vmatpush2.msra.mxu0 0.0
    %223 = vmatprep.subr.mxu0 0.0
    %224 = vmatpush2.msra.mxu0 0.0
    %225 = vmatprep.subr.mxu0 0.0
    %226 = vmatpush2.msra.mxu0 0.0
    %227 = vmatprep.subr.mxu0 0.0
    %228 = vmatpush2.msra.mxu0 0.0
    %229 = vmatprep.subr.mxu0 0.0
    %230 = vmatpush2.msra.mxu0 0.0
    %231 = vmatprep.subr.mxu0 0.0
    %232 = vmatpush2.msra.mxu0 0.0
    %233 = vmatprep.subr.mxu0 0.0
    %234 = vmatpush2.msra.mxu0 0.0
    %235 = vmatprep.mubr.f32.mxu0 0.0
    %236 = vmatmul.mubr.f32.gmra.mxu0 %v147
    %v237 = vpop.f32.mrf.mxu0
    %v238 = vadd.f32 %v169, %v237
    %v239 = vpop.f32.mrf.mxu0
    %240 = vdwg.mxu0
    %v241 = vmul.f32 %v238, 0.5
    %v242 = vtanh.pop %v241
    %v243 = vadd.f32 %v242, 1.0
    %v244 = vmul.f32 %v243, 0.5
    %v245 = vld [vmem:[#allocation5] sm:$0xff]
    %v246 = vld [vmem:[#allocation5 + $0x8] sm:$0xff]
    %v247 = vld [vmem:[#allocation5 + $0x10] sm:$0xff]
    %v248 = vld [vmem:[#allocation5 + $0x18] sm:$0xff]
    %v249 = vld [vmem:[#allocation5 + $0x20] sm:$0xff]
    %v250 = vld [vmem:[#allocation5 + $0x28] sm:$0xff]
    %v251 = vld [vmem:[#allocation5 + $0x30] sm:$0xff]
    %v252 = vld [vmem:[#allocation5 + $0x38] sm:$0xff]
    %v253 = vld [vmem:[#allocation5 + $0x40] sm:$0xff]
    %v254 = vld [vmem:[#allocation5 + $0x48] sm:$0xff]
    %v255 = vld [vmem:[#allocation5 + $0x50] sm:$0xff]
    %v256 = vld [vmem:[#allocation5 + $0x58] sm:$0xff]
    %v257 = vld [vmem:[#allocation5 + $0x60] sm:$0xff]
    %v258 = vld [vmem:[#allocation5 + $0x68] sm:$0xff]
    %v259 = vld [vmem:[#allocation5 + $0x70] sm:$0xff]
    %v260 = vld [vmem:[#allocation5 + $0x78] sm:$0xff]
    %v261 = vld [vmem:[%s6] sm:$0x1]
    %v263 = vlaneseq
    %v264 = vshrl.u32 %v263, 7
    %v265 = vsub.s32 0, %v264
    %v266 = vrot.slane %v261, %v265
    %268 = vmatprep.subr.mxu0 0.0
    %269 = vmatpush1.msra.mxu0 %v260
    %270 = vmatprep.subr.mxu0 0.0
    %271 = vmatpush1.msra.mxu0 %v259
    %272 = vmatprep.subr.mxu0 0.0
    %273 = vmatpush1.msra.mxu0 %v258
    %274 = vmatprep.subr.mxu0 0.0
    %275 = vmatpush1.msra.mxu0 %v257
    %276 = vmatprep.subr.mxu0 0.0
    %277 = vmatpush1.msra.mxu0 %v256
    %278 = vmatprep.subr.mxu0 0.0
    %279 = vmatpush1.msra.mxu0 %v255
    %280 = vmatprep.subr.mxu0 0.0
    %281 = vmatpush1.msra.mxu0 %v254
    %282 = vmatprep.subr.mxu0 0.0
    %283 = vmatpush1.msra.mxu0 %v253
    %284 = vmatprep.subr.mxu0 0.0
    %285 = vmatpush1.msra.mxu0 %v252
    %286 = vmatprep.subr.mxu0 0.0
    %287 = vmatpush1.msra.mxu0 %v251
    %288 = vmatprep.subr.mxu0 0.0
    %289 = vmatpush1.msra.mxu0 %v250
    %290 = vmatprep.subr.mxu0 0.0
    %291 = vmatpush1.msra.mxu0 %v249
    %292 = vmatprep.subr.mxu0 0.0
    %293 = vmatpush1.msra.mxu0 %v248
    %294 = vmatprep.subr.mxu0 0.0
    %295 = vmatpush1.msra.mxu0 %v247
    %296 = vmatprep.subr.mxu0 0.0
    %297 = vmatpush1.msra.mxu0 %v246
    %298 = vmatprep.subr.mxu0 0.0
    %299 = vmatpush1.msra.mxu0 %v245
    %300 = vmatprep.subr.mxu0 0.0
    %301 = vmatpush2.msra.mxu0 0.0
    %302 = vmatprep.subr.mxu0 0.0
    %303 = vmatpush2.msra.mxu0 0.0
    %304 = vmatprep.subr.mxu0 0.0
    %305 = vmatpush2.msra.mxu0 0.0
    %306 = vmatprep.subr.mxu0 0.0
    %307 = vmatpush2.msra.mxu0 0.0
    %308 = vmatprep.subr.mxu0 0.0
    %309 = vmatpush2.msra.mxu0 0.0
    %310 = vmatprep.subr.mxu0 0.0
    %311 = vmatpush2.msra.mxu0 0.0
    %312 = vmatprep.subr.mxu0 0.0
    %313 = vmatpush2.msra.mxu0 0.0
    %314 = vmatprep.subr.mxu0 0.0
    %315 = vmatpush2.msra.mxu0 0.0
    %316 = vmatprep.subr.mxu0 0.0
    %317 = vmatpush2.msra.mxu0 0.0
    %318 = vmatprep.subr.mxu0 0.0
    %319 = vmatpush2.msra.mxu0 0.0
    %320 = vmatprep.subr.mxu0 0.0
    %321 = vmatpush2.msra.mxu0 0.0
    %322 = vmatprep.subr.mxu0 0.0
    %323 = vmatpush2.msra.mxu0 0.0
    %324 = vmatprep.subr.mxu0 0.0
    %325 = vmatpush2.msra.mxu0 0.0
    %326 = vmatprep.subr.mxu0 0.0
    %327 = vmatpush2.msra.mxu0 0.0
    %328 = vmatprep.subr.mxu0 0.0
    %329 = vmatpush2.msra.mxu0 0.0
    %330 = vmatprep.subr.mxu0 0.0
    %331 = vmatpush2.msra.mxu0 0.0
    %332 = vmatprep.mubr.f32.mxu0 0.0
    %333 = vmatmul.mubr.f32.gmra.mxu0 %v244
    %v334 = vpop.f32.mrf.mxu0
    %v335 = vadd.f32 %v266, %v334
    %v336 = vpop.f32.mrf.mxu0
    %337 = vdwg.mxu0
    %v338 = vld [vmem:[%s7] sm:$0xff]
    %v339 = vld [vmem:[%s7 + $0x8] sm:$0xff]
    %v340 = vld [vmem:[%s7 + $0x10] sm:$0xff]
    %v341 = vld [vmem:[%s7 + $0x18] sm:$0xff]
    %v342 = vld [vmem:[%s7 + $0x20] sm:$0xff]
    %v343 = vld [vmem:[%s7 + $0x28] sm:$0xff]
    %v344 = vld [vmem:[%s7 + $0x30] sm:$0xff]
    %v345 = vld [vmem:[%s7 + $0x38] sm:$0xff]
    %v346 = vld [vmem:[%s7 + $0x40] sm:$0xff]
    %v347 = vld [vmem:[%s7 + $0x48] sm:$0xff]
    %v348 = vld [vmem:[%s7 + $0x50] sm:$0xff]
    %v349 = vld [vmem:[%s7 + $0x58] sm:$0xff]
    %v350 = vld [vmem:[%s7 + $0x60] sm:$0xff]
    %v351 = vld [vmem:[%s7 + $0x68] sm:$0xff]
    %v352 = vld [vmem:[%s7 + $0x70] sm:$0xff]
    %v353 = vld [vmem:[%s7 + $0x78] sm:$0xff]
    %v354 = vld [vmem:[%s8] sm:$0x1]
    %v356 = vlaneseq
    %v357 = vshrl.u32 %v356, 7
    %v358 = vsub.s32 0, %v357
    %v359 = vrot.slane %v354, %v358
    %361 = vmatprep.subr.mxu0 0.0
    %362 = vmatpush1.msra.mxu0 %v353
    %363 = vmatprep.subr.mxu0 0.0
    %364 = vmatpush1.msra.mxu0 %v352
    %365 = vmatprep.subr.mxu0 0.0
    %366 = vmatpush1.msra.mxu0 %v351
    %367 = vmatprep.subr.mxu0 0.0
    %368 = vmatpush1.msra.mxu0 %v350
    %369 = vmatprep.subr.mxu0 0.0
    %370 = vmatpush1.msra.mxu0 %v349
    %371 = vmatprep.subr.mxu0 0.0
    %372 = vmatpush1.msra.mxu0 %v348
    %373 = vmatprep.subr.mxu0 0.0
    %374 = vmatpush1.msra.mxu0 %v347
    %375 = vmatprep.subr.mxu0 0.0
    %376 = vmatpush1.msra.mxu0 %v346
    %377 = vmatprep.subr.mxu0 0.0
    %378 = vmatpush1.msra.mxu0 %v345
    %379 = vmatprep.subr.mxu0 0.0
    %380 = vmatpush1.msra.mxu0 %v344
    %381 = vmatprep.subr.mxu0 0.0
    %382 = vmatpush1.msra.mxu0 %v343
    %383 = vmatprep.subr.mxu0 0.0
    %384 = vmatpush1.msra.mxu0 %v342
    %385 = vmatprep.subr.mxu0 0.0
    %386 = vmatpush1.msra.mxu0 %v341
    %387 = vmatprep.subr.mxu0 0.0
    %388 = vmatpush1.msra.mxu0 %v340
    %389 = vmatprep.subr.mxu0 0.0
    %390 = vmatpush1.msra.mxu0 %v339
    %391 = vmatprep.subr.mxu0 0.0
    %392 = vmatpush1.msra.mxu0 %v338
    %393 = vmatprep.subr.mxu0 0.0
    %394 = vmatpush2.msra.mxu0 0.0
    %395 = vmatprep.subr.mxu0 0.0
    %396 = vmatpush2.msra.mxu0 0.0
    %397 = vmatprep.subr.mxu0 0.0
    %398 = vmatpush2.msra.mxu0 0.0
    %399 = vmatprep.subr.mxu0 0.0
    %400 = vmatpush2.msra.mxu0 0.0
    %401 = vmatprep.subr.mxu0 0.0
    %402 = vmatpush2.msra.mxu0 0.0
    %403 = vmatprep.subr.mxu0 0.0
    %404 = vmatpush2.msra.mxu0 0.0
    %405 = vmatprep.subr.mxu0 0.0
    %406 = vmatpush2.msra.mxu0 0.0
    %407 = vmatprep.subr.mxu0 0.0
    %408 = vmatpush2.msra.mxu0 0.0
    %409 = vmatprep.subr.mxu0 0.0
    %410 = vmatpush2.msra.mxu0 0.0
    %411 = vmatprep.subr.mxu0 0.0
    %412 = vmatpush2.msra.mxu0 0.0
    %413 = vmatprep.subr.mxu0 0.0
    %414 = vmatpush2.msra.mxu0 0.0
    %415 = vmatprep.subr.mxu0 0.0
    %416 = vmatpush2.msra.mxu0 0.0
    %417 = vmatprep.subr.mxu0 0.0
    %418 = vmatpush2.msra.mxu0 0.0
    %419 = vmatprep.subr.mxu0 0.0
    %420 = vmatpush2.msra.mxu0 0.0
    %421 = vmatprep.subr.mxu0 0.0
    %422 = vmatpush2.msra.mxu0 0.0
    %423 = vmatprep.subr.mxu0 0.0
    %424 = vmatpush2.msra.mxu0 0.0
    %425 = vmatprep.mubr.f32.mxu0 0.0
    %426 = vmatmul.mubr.f32.gmra.mxu0 %v335
    %v427 = vpop.f32.mrf.mxu0
    %v428 = vadd.f32 %v359, %v427
    %v429 = vpop.f32.mrf.mxu0
    %430 = vdwg.mxu0
    %v431 = vtanh.pop %v428
    %vm432 = vcmask 130048
    %433 = vst.msk [vmem:[#allocation7] sm:$0xff] %vm432, %v431
    // Predicated region
    $region46: #{tpu_custom_call.1} parent=1 // pred_check
      _
    $region47: #{tpu_custom_call.1} parent=1 // pred_check_branch
      %435 = sbr.rel (0) target = $region49
    $region48: #{tpu_custom_call.1} parent=1 // pred_region
      %s437 = ssub.s32 128, 128
      %438 = vsyncadd [#allocation4], %s437
      %s440 = sshll.u32 [#allocation7], 4
      %s441 = int_to_ptr.vmem [resolvable:$true] %s440
      %443 = dma.vmem_to_hbm [thread:$0]  %s441, 128, %s9, [#allocation4]
    $region49: #{tpu_custom_call.1} parent=1 // pred_fallthru
      _
    // Predicated region
    $region50: #{tpu_custom_call.1} parent=1 // pred_check
      _
    $region51: #{tpu_custom_call.1} parent=1 // pred_check_branch
      %445 = sbr.rel (0) target = $region53
    $region52: #{tpu_custom_call.1} parent=1 // pred_region
      %446 = dma.done [#allocation4], 128
    $region53: #{tpu_custom_call.1} parent=1 // pred_fallthru
      _
    %447 = vsyncpa [#allocation3], 1
    %448 = vsyncpa [#allocation6], 1
    %449 = vsyncpa [#allocation4], 1

</llo_original>
